<compile_context>
chip_gen: v7x
topology: tpu7x:2x2x1
jax: 0.10.0
libtpu: 0.0.40
codegen_flags: <defaults>
</compile_context>

<pallas_src>
import functools

import jax
import jax.numpy as jnp
import numpy as np
from jax.experimental import pallas as pl
from jax.experimental.pallas import tpu as pltpu


# -----------------------------------------------------------------------------
# Fused kernel: one batch element per grid step.
# -----------------------------------------------------------------------------
def _transformer_layer_kernel(x_ref, wqkv_ref, bqkv_ref, wo_ref, bo_ref,
                              w21_ref, o_ref, *, num_heads, scale):
    L = o_ref.shape[1]
    C = o_ref.shape[2]
    d = C // num_heads

    xb = x_ref[0].astype(jnp.float32)                              # (L, C)

    # Fused QKV projection: single K=C matmul producing (L, 3C).
    qkv = jnp.dot(xb, wqkv_ref[...].astype(jnp.float32),
                  preferred_element_type=jnp.float32)
    qkv = qkv + bqkv_ref[...].astype(jnp.float32)                  # (L, 3C)
    q = qkv[:, 0 * C:1 * C] * scale
    k = qkv[:, 1 * C:2 * C]
    v = qkv[:, 2 * C:3 * C]

    # Per-head scaled-dot-product attention (static head loop, all in-register).
    head_outs = []
    for h in range(num_heads):
        sl = slice(h * d, (h + 1) * d)
        qh, kh, vh = q[:, sl], k[:, sl], v[:, sl]
        s = jax.lax.dot_general(qh, kh, (((1,), (1,)), ((), ())),
                                preferred_element_type=jnp.float32)  # (L, L)
        m = jnp.max(s, axis=-1, keepdims=True)
        p = jnp.exp(s - m)
        p = p / jnp.sum(p, axis=-1, keepdims=True)
        head_outs.append(jnp.dot(p, vh, preferred_element_type=jnp.float32))
    attn = jnp.concatenate(head_outs, axis=-1)                     # (L, C)

    # Output projection + first residual.
    y = jnp.dot(attn, wo_ref[...].astype(jnp.float32),
                preferred_element_type=jnp.float32)
    y = y + bo_ref[...].astype(jnp.float32) + xb

    # Folded fc2(fc1(.)) + second residual.
    out = jnp.dot(y, w21_ref[...].astype(jnp.float32),
                  preferred_element_type=jnp.float32) + y
    o_ref[0] = out.astype(o_ref.dtype)


# -----------------------------------------------------------------------------
# Wrapper: weight folding + pallas_call.
# -----------------------------------------------------------------------------
@functools.partial(jax.jit, static_argnames=("num_heads",))
def transformer_layer_forward(x, params, *, num_heads):
    # x: (L, N, C)  -- PyTorch nn.MultiheadAttention default (seq, batch, embed)
    L, N, C = x.shape
    d = C // num_heads
    scale = float(d) ** -0.5

    wi, bi = params["in_proj_w"], params["in_proj_b"]
    a_q = (wi[0 * C:1 * C] @ params["wq"]).T          # (C, C): x @ a_q = in_proj_q(q(x))
    a_k = (wi[1 * C:2 * C] @ params["wk"]).T
    a_v = (wi[2 * C:3 * C] @ params["wv"]).T
    w_qkv = jnp.concatenate([a_q, a_k, a_v], axis=1)  # (C, 3C)
    b_qkv = bi.reshape(1, 3 * C)
    wo_t = params["out_proj_w"].T                     # (C, C)
    b_o = params["out_proj_b"].reshape(1, C)
    w21 = params["fc1_w"].T @ params["fc2_w"].T       # (C, C): fc2(fc1(x)) = x @ w21

    xb = jnp.transpose(x, (1, 0, 2))                  # (N, L, C): batch-major blocks

    out = pl.pallas_call(
        functools.partial(_transformer_layer_kernel,
                          num_heads=num_heads, scale=scale),
        out_shape=jax.ShapeDtypeStruct((N, L, C), x.dtype),
        grid=(N,),
        in_specs=[
            pl.BlockSpec((1, L, C), lambda n: (n, 0, 0)),     # x (one batch elem)
            pl.BlockSpec((C, 3 * C), lambda n: (0, 0)),       # fused QKV weight
            pl.BlockSpec((1, 3 * C), lambda n: (0, 0)),       # fused QKV bias
            pl.BlockSpec((C, C), lambda n: (0, 0)),           # out_proj weight^T
            pl.BlockSpec((1, C), lambda n: (0, 0)),           # out_proj bias
            pl.BlockSpec((C, C), lambda n: (0, 0)),           # folded fc1/fc2
        ],
        out_specs=pl.BlockSpec((1, L, C), lambda n: (n, 0, 0)),
        compiler_params=pltpu.CompilerParams(
            dimension_semantics=("parallel",)),
    )(xb, w_qkv, b_qkv, wo_t, b_o, w21)
    return jnp.transpose(out, (1, 0, 2))              # back to (L, N, C)


# -----------------------------------------------------------------------------
# Pure-JAX reference following PyTorch semantics exactly (unfused weights).
# -----------------------------------------------------------------------------
def transformer_layer_reference(x, params, *, num_heads):
    L, N, C = x.shape
    d = C // num_heads
    q = x @ params["wq"].T
    k = x @ params["wk"].T
    v = x @ params["wv"].T
    wi, bi = params["in_proj_w"], params["in_proj_b"]
    q = q @ wi[:C].T + bi[:C]
    k = k @ wi[C:2 * C].T + bi[C:2 * C]
    v = v @ wi[2 * C:].T + bi[2 * C:]

    def split_heads(t):
        return t.reshape(L, N * num_heads, d).transpose(1, 0, 2)  # (N*H, L, d)

    qh, kh, vh = split_heads(q), split_heads(k), split_heads(v)
    qh = qh * (float(d) ** -0.5)
    s = jnp.einsum("bld,bmd->blm", qh, kh)
    p = jax.nn.softmax(s, axis=-1)
    o = jnp.einsum("blm,bmd->bld", p, vh)
    o = o.transpose(1, 0, 2).reshape(L, N, C)
    o = o @ params["out_proj_w"].T + params["out_proj_b"]
    x1 = o + x
    x2 = (x1 @ params["fc1_w"].T) @ params["fc2_w"].T + x1
    return x2


def init_params(key, c):
    ks = jax.random.split(key, 9)
    s = 0.1
    return {
        "wq": s * jax.random.normal(ks[0], (c, c), jnp.float32),
        "wk": s * jax.random.normal(ks[1], (c, c), jnp.float32),
        "wv": s * jax.random.normal(ks[2], (c, c), jnp.float32),
        "in_proj_w": s * jax.random.normal(ks[3], (3 * c, c), jnp.float32),
        "in_proj_b": s * jax.random.normal(ks[4], (3 * c,), jnp.float32),
        "out_proj_w": s * jax.random.normal(ks[5], (c, c), jnp.float32),
        "out_proj_b": s * jax.random.normal(ks[6], (c,), jnp.float32),
        "fc1_w": s * jax.random.normal(ks[7], (c, c), jnp.float32),
        "fc2_w": s * jax.random.normal(ks[8], (c, c), jnp.float32),
    }


if __name__ == "__main__":
    L, N, C, H = 8, 2, 32, 4   # seq=8, batch=2, embed=32, heads=4

    key = jax.random.PRNGKey(0)
    kx, kp = jax.random.split(key)
    x = jax.random.normal(kx, (L, N, C), jnp.float32)   # (seq, batch, embed)
    params = init_params(kp, C)

    out = jax.block_until_ready(
        transformer_layer_forward(x, params, num_heads=H))
    ref = jax.block_until_ready(
        transformer_layer_reference(x, params, num_heads=H))
    np.testing.assert_allclose(np.asarray(out), np.asarray(ref),
                               rtol=1e-4, atol=1e-4)
    print("KERNEL_OK")
</pallas_src>

<mosaic_0001>
module attributes {stable_mosaic.version = 11 : i64} {
  func.func @_transformer_layer_kernel(%arg0: i32, %arg1: memref<1x8x32xf32, #tpu.memory_space<vmem>>, %arg2: memref<32x96xf32, #tpu.memory_space<vmem>>, %arg3: memref<1x96xf32, #tpu.memory_space<vmem>>, %arg4: memref<32x32xf32, #tpu.memory_space<vmem>>, %arg5: memref<1x32xf32, #tpu.memory_space<vmem>>, %arg6: memref<32x32xf32, #tpu.memory_space<vmem>>, %arg7: memref<1x8x32xf32, #tpu.memory_space<vmem>>) attributes {dimension_semantics = [#tpu.dimension_semantics<parallel>], iteration_bounds = array<i64: 2>, scalar_prefetch = 0 : i64, scratch_operands = 0 : i64, tpu.core_type = #tpu.core_type<tc>, window_params = [{transform_indices = @transform_0, window_bounds = array<i64: 1, 8, 32>}, {pipeline_mode = #tpu.pipeline_mode<synchronous>, transform_indices = @transform_1, window_bounds = array<i64: 32, 96>}, {pipeline_mode = #tpu.pipeline_mode<synchronous>, transform_indices = @transform_2, window_bounds = array<i64: 1, 96>}, {pipeline_mode = #tpu.pipeline_mode<synchronous>, transform_indices = @transform_3, window_bounds = array<i64: 32, 32>}, {pipeline_mode = #tpu.pipeline_mode<synchronous>, transform_indices = @transform_4, window_bounds = array<i64: 1, 32>}, {pipeline_mode = #tpu.pipeline_mode<synchronous>, transform_indices = @transform_5, window_bounds = array<i64: 32, 32>}, {transform_indices = @transform_6, window_bounds = array<i64: 1, 8, 32>}]} {
    %c0 = arith.constant 0 : index
    %c0_0 = arith.constant 0 : index
    %c0_1 = arith.constant 0 : index
    %0 = vector.load %arg1[%c0, %c0_0, %c0_1] : memref<1x8x32xf32, #tpu.memory_space<vmem>>, vector<1x8x32xf32>
    %1 = vector.shape_cast %0 : vector<1x8x32xf32> to vector<8x32xf32>
    %c0_2 = arith.constant 0 : index
    %c0_3 = arith.constant 0 : index
    %2 = vector.load %arg2[%c0_2, %c0_3] : memref<32x96xf32, #tpu.memory_space<vmem>>, vector<32x96xf32>
    %cst = arith.constant dense<0.000000e+00> : vector<8x96xf32>
    %3 = tpu.matmul %1, %2, %cst {dimension_numbers = #tpu.dot_dimension_numbers<[1], [0], [0], [1], [0, 0, 1, 1], [], []>} : vector<8x32xf32>, vector<32x96xf32>, vector<8x96xf32> -> vector<8x96xf32>
    %c0_4 = arith.constant 0 : index
    %c0_5 = arith.constant 0 : index
    %4 = vector.load %arg3[%c0_4, %c0_5] : memref<1x96xf32, #tpu.memory_space<vmem>>, vector<1x96xf32>
    %5 = vector.broadcast %4 : vector<1x96xf32> to vector<8x96xf32>
    %6 = arith.addf %3, %5 : vector<8x96xf32>
    %7 = vector.extract_strided_slice %6 {offsets = [0, 0], sizes = [8, 32], strides = [1, 1]} : vector<8x96xf32> to vector<8x32xf32>
    %cst_6 = arith.constant 0.353553385 : f32
    %8 = vector.broadcast %cst_6 : f32 to vector<8x32xf32>
    %9 = arith.mulf %7, %8 : vector<8x32xf32>
    %10 = vector.extract_strided_slice %6 {offsets = [0, 32], sizes = [8, 32], strides = [1, 1]} : vector<8x96xf32> to vector<8x32xf32>
    %11 = vector.extract_strided_slice %6 {offsets = [0, 64], sizes = [8, 32], strides = [1, 1]} : vector<8x96xf32> to vector<8x32xf32>
    %12 = vector.extract_strided_slice %9 {offsets = [0, 0], sizes = [8, 8], strides = [1, 1]} : vector<8x32xf32> to vector<8x8xf32>
    %13 = vector.extract_strided_slice %10 {offsets = [0, 0], sizes = [8, 8], strides = [1, 1]} : vector<8x32xf32> to vector<8x8xf32>
    %14 = vector.extract_strided_slice %11 {offsets = [0, 0], sizes = [8, 8], strides = [1, 1]} : vector<8x32xf32> to vector<8x8xf32>
    %cst_7 = arith.constant dense<0.000000e+00> : vector<8x8xf32>
    %15 = tpu.matmul %12, %13, %cst_7 {dimension_numbers = #tpu.dot_dimension_numbers<[1], [1], [0], [0], [0, 0, 1, 0], [], []>} : vector<8x8xf32>, vector<8x8xf32>, vector<8x8xf32> -> vector<8x8xf32>
    %cst_8 = arith.constant dense<0xFF800000> : vector<8xf32>
    %16 = vector.multi_reduction <maximumf>, %15, %cst_8 [1] : vector<8x8xf32> to vector<8xf32>
    %17 = vector.shape_cast %16 : vector<8xf32> to vector<8x1xf32>
    %18 = vector.broadcast %17 : vector<8x1xf32> to vector<8x8xf32>
    %19 = arith.subf %15, %18 : vector<8x8xf32>
    %20 = math.exp %19 : vector<8x8xf32>
    %cst_9 = arith.constant dense<0.000000e+00> : vector<8xf32>
    %21 = vector.multi_reduction <add>, %20, %cst_9 [1] : vector<8x8xf32> to vector<8xf32>
    %22 = vector.shape_cast %21 : vector<8xf32> to vector<8x1xf32>
    %23 = vector.broadcast %22 : vector<8x1xf32> to vector<8x8xf32>
    %24 = arith.divf %20, %23 : vector<8x8xf32>
    %cst_10 = arith.constant dense<0.000000e+00> : vector<8x8xf32>
    %25 = tpu.matmul %24, %14, %cst_10 {dimension_numbers = #tpu.dot_dimension_numbers<[1], [0], [0], [1], [0, 0, 1, 1], [], []>} : vector<8x8xf32>, vector<8x8xf32>, vector<8x8xf32> -> vector<8x8xf32>
    %26 = vector.extract_strided_slice %9 {offsets = [0, 8], sizes = [8, 8], strides = [1, 1]} : vector<8x32xf32> to vector<8x8xf32>
    %27 = vector.extract_strided_slice %10 {offsets = [0, 8], sizes = [8, 8], strides = [1, 1]} : vector<8x32xf32> to vector<8x8xf32>
    %28 = vector.extract_strided_slice %11 {offsets = [0, 8], sizes = [8, 8], strides = [1, 1]} : vector<8x32xf32> to vector<8x8xf32>
    %cst_11 = arith.constant dense<0.000000e+00> : vector<8x8xf32>
    %29 = tpu.matmul %26, %27, %cst_11 {dimension_numbers = #tpu.dot_dimension_numbers<[1], [1], [0], [0], [0, 0, 1, 0], [], []>} : vector<8x8xf32>, vector<8x8xf32>, vector<8x8xf32> -> vector<8x8xf32>
    %cst_12 = arith.constant dense<0xFF800000> : vector<8xf32>
    %30 = vector.multi_reduction <maximumf>, %29, %cst_12 [1] : vector<8x8xf32> to vector<8xf32>
    %31 = vector.shape_cast %30 : vector<8xf32> to vector<8x1xf32>
    %32 = vector.broadcast %31 : vector<8x1xf32> to vector<8x8xf32>
    %33 = arith.subf %29, %32 : vector<8x8xf32>
    %34 = math.exp %33 : vector<8x8xf32>
    %cst_13 = arith.constant dense<0.000000e+00> : vector<8xf32>
    %35 = vector.multi_reduction <add>, %34, %cst_13 [1] : vector<8x8xf32> to vector<8xf32>
    %36 = vector.shape_cast %35 : vector<8xf32> to vector<8x1xf32>
    %37 = vector.broadcast %36 : vector<8x1xf32> to vector<8x8xf32>
    %38 = arith.divf %34, %37 : vector<8x8xf32>
    %cst_14 = arith.constant dense<0.000000e+00> : vector<8x8xf32>
    %39 = tpu.matmul %38, %28, %cst_14 {dimension_numbers = #tpu.dot_dimension_numbers<[1], [0], [0], [1], [0, 0, 1, 1], [], []>} : vector<8x8xf32>, vector<8x8xf32>, vector<8x8xf32> -> vector<8x8xf32>
    %40 = vector.extract_strided_slice %9 {offsets = [0, 16], sizes = [8, 8], strides = [1, 1]} : vector<8x32xf32> to vector<8x8xf32>
    %41 = vector.extract_strided_slice %10 {offsets = [0, 16], sizes = [8, 8], strides = [1, 1]} : vector<8x32xf32> to vector<8x8xf32>
    %42 = vector.extract_strided_slice %11 {offsets = [0, 16], sizes = [8, 8], strides = [1, 1]} : vector<8x32xf32> to vector<8x8xf32>
    %cst_15 = arith.constant dense<0.000000e+00> : vector<8x8xf32>
    %43 = tpu.matmul %40, %41, %cst_15 {dimension_numbers = #tpu.dot_dimension_numbers<[1], [1], [0], [0], [0, 0, 1, 0], [], []>} : vector<8x8xf32>, vector<8x8xf32>, vector<8x8xf32> -> vector<8x8xf32>
    %cst_16 = arith.constant dense<0xFF800000> : vector<8xf32>
    %44 = vector.multi_reduction <maximumf>, %43, %cst_16 [1] : vector<8x8xf32> to vector<8xf32>
    %45 = vector.shape_cast %44 : vector<8xf32> to vector<8x1xf32>
    %46 = vector.broadcast %45 : vector<8x1xf32> to vector<8x8xf32>
    %47 = arith.subf %43, %46 : vector<8x8xf32>
    %48 = math.exp %47 : vector<8x8xf32>
    %cst_17 = arith.constant dense<0.000000e+00> : vector<8xf32>
    %49 = vector.multi_reduction <add>, %48, %cst_17 [1] : vector<8x8xf32> to vector<8xf32>
    %50 = vector.shape_cast %49 : vector<8xf32> to vector<8x1xf32>
    %51 = vector.broadcast %50 : vector<8x1xf32> to vector<8x8xf32>
    %52 = arith.divf %48, %51 : vector<8x8xf32>
    %cst_18 = arith.constant dense<0.000000e+00> : vector<8x8xf32>
    %53 = tpu.matmul %52, %42, %cst_18 {dimension_numbers = #tpu.dot_dimension_numbers<[1], [0], [0], [1], [0, 0, 1, 1], [], []>} : vector<8x8xf32>, vector<8x8xf32>, vector<8x8xf32> -> vector<8x8xf32>
    %54 = vector.extract_strided_slice %9 {offsets = [0, 24], sizes = [8, 8], strides = [1, 1]} : vector<8x32xf32> to vector<8x8xf32>
    %55 = vector.extract_strided_slice %10 {offsets = [0, 24], sizes = [8, 8], strides = [1, 1]} : vector<8x32xf32> to vector<8x8xf32>
    %56 = vector.extract_strided_slice %11 {offsets = [0, 24], sizes = [8, 8], strides = [1, 1]} : vector<8x32xf32> to vector<8x8xf32>
    %cst_19 = arith.constant dense<0.000000e+00> : vector<8x8xf32>
    %57 = tpu.matmul %54, %55, %cst_19 {dimension_numbers = #tpu.dot_dimension_numbers<[1], [1], [0], [0], [0, 0, 1, 0], [], []>} : vector<8x8xf32>, vector<8x8xf32>, vector<8x8xf32> -> vector<8x8xf32>
    %cst_20 = arith.constant dense<0xFF800000> : vector<8xf32>
    %58 = vector.multi_reduction <maximumf>, %57, %cst_20 [1] : vector<8x8xf32> to vector<8xf32>
    %59 = vector.shape_cast %58 : vector<8xf32> to vector<8x1xf32>
    %60 = vector.broadcast %59 : vector<8x1xf32> to vector<8x8xf32>
    %61 = arith.subf %57, %60 : vector<8x8xf32>
    %62 = math.exp %61 : vector<8x8xf32>
    %cst_21 = arith.constant dense<0.000000e+00> : vector<8xf32>
    %63 = vector.multi_reduction <add>, %62, %cst_21 [1] : vector<8x8xf32> to vector<8xf32>
    %64 = vector.shape_cast %63 : vector<8xf32> to vector<8x1xf32>
    %65 = vector.broadcast %64 : vector<8x1xf32> to vector<8x8xf32>
    %66 = arith.divf %62, %65 : vector<8x8xf32>
    %cst_22 = arith.constant dense<0.000000e+00> : vector<8x8xf32>
    %67 = tpu.matmul %66, %56, %cst_22 {dimension_numbers = #tpu.dot_dimension_numbers<[1], [0], [0], [1], [0, 0, 1, 1], [], []>} : vector<8x8xf32>, vector<8x8xf32>, vector<8x8xf32> -> vector<8x8xf32>
    %68 = tpu.concatenate %25, %39, %53, %67 in 1 : vector<8x8xf32>, vector<8x8xf32>, vector<8x8xf32>, vector<8x8xf32> -> vector<8x32xf32>
    %c0_23 = arith.constant 0 : index
    %c0_24 = arith.constant 0 : index
    %69 = vector.load %arg4[%c0_23, %c0_24] : memref<32x32xf32, #tpu.memory_space<vmem>>, vector<32x32xf32>
    %cst_25 = arith.constant dense<0.000000e+00> : vector<8x32xf32>
    %70 = tpu.matmul %68, %69, %cst_25 {dimension_numbers = #tpu.dot_dimension_numbers<[1], [0], [0], [1], [0, 0, 1, 1], [], []>} : vector<8x32xf32>, vector<32x32xf32>, vector<8x32xf32> -> vector<8x32xf32>
    %c0_26 = arith.constant 0 : index
    %c0_27 = arith.constant 0 : index
    %71 = vector.load %arg5[%c0_26, %c0_27] : memref<1x32xf32, #tpu.memory_space<vmem>>, vector<1x32xf32>
    %72 = vector.broadcast %71 : vector<1x32xf32> to vector<8x32xf32>
    %73 = arith.addf %70, %72 : vector<8x32xf32>
    %74 = arith.addf %73, %1 : vector<8x32xf32>
    %c0_28 = arith.constant 0 : index
    %c0_29 = arith.constant 0 : index
    %75 = vector.load %arg6[%c0_28, %c0_29] : memref<32x32xf32, #tpu.memory_space<vmem>>, vector<32x32xf32>
    %cst_30 = arith.constant dense<0.000000e+00> : vector<8x32xf32>
    %76 = tpu.matmul %74, %75, %cst_30 {dimension_numbers = #tpu.dot_dimension_numbers<[1], [0], [0], [1], [0, 0, 1, 1], [], []>} : vector<8x32xf32>, vector<32x32xf32>, vector<8x32xf32> -> vector<8x32xf32>
    %77 = arith.addf %76, %74 : vector<8x32xf32>
    %c0_31 = arith.constant 0 : index
    %c0_32 = arith.constant 0 : index
    %c0_33 = arith.constant 0 : index
    %78 = vector.load %arg7[%c0_31, %c0_32, %c0_33] : memref<1x8x32xf32, #tpu.memory_space<vmem>>, vector<1x8x32xf32>
    %79 = vector.shape_cast %78 : vector<1x8x32xf32> to vector<8x32xf32>
    %80 = vector.shape_cast %77 : vector<8x32xf32> to vector<1x8x32xf32>
    tpu.vector_store %arg7[%c0_31, %c0_32, %c0_33], %80 {strides = array<i32>} : memref<1x8x32xf32, #tpu.memory_space<vmem>>, vector<1x8x32xf32>,
    return
  }
  func.func @transform_0(%arg0: i32) -> (i32, i32, i32) {
    %c0_i32 = arith.constant 0 : i32
    %c0_i32_0 = arith.constant 0 : i32
    %c0_i32_1 = arith.constant 0 : i32
    return %arg0, %c0_i32, %c0_i32_0 : i32, i32, i32
  }
  func.func @transform_1(%arg0: i32) -> (i32, i32) {
    %c0_i32 = arith.constant 0 : i32
    %c0_i32_0 = arith.constant 0 : i32
    %c0_i32_1 = arith.constant 0 : i32
    return %c0_i32, %c0_i32_0 : i32, i32
  }
  func.func @transform_2(%arg0: i32) -> (i32, i32) {
    %c0_i32 = arith.constant 0 : i32
    %c0_i32_0 = arith.constant 0 : i32
    %c0_i32_1 = arith.constant 0 : i32
    return %c0_i32, %c0_i32_0 : i32, i32
  }
  func.func @transform_3(%arg0: i32) -> (i32, i32) {
    %c0_i32 = arith.constant 0 : i32
    %c0_i32_0 = arith.constant 0 : i32
    %c0_i32_1 = arith.constant 0 : i32
    return %c0_i32, %c0_i32_0 : i32, i32
  }
  func.func @transform_4(%arg0: i32) -> (i32, i32) {
    %c0_i32 = arith.constant 0 : i32
    %c0_i32_0 = arith.constant 0 : i32
    %c0_i32_1 = arith.constant 0 : i32
    return %c0_i32, %c0_i32_0 : i32, i32
  }
  func.func @transform_5(%arg0: i32) -> (i32, i32) {
    %c0_i32 = arith.constant 0 : i32
    %c0_i32_0 = arith.constant 0 : i32
    %c0_i32_1 = arith.constant 0 : i32
    return %c0_i32, %c0_i32_0 : i32, i32
  }
  func.func @transform_6(%arg0: i32) -> (i32, i32, i32) {
    %c0_i32 = arith.constant 0 : i32
    %c0_i32_0 = arith.constant 0 : i32
    %c0_i32_1 = arith.constant 0 : i32
    return %arg0, %c0_i32, %c0_i32_0 : i32, i32, i32
  }
}

</mosaic_0001>

<llo_original>
// kernel: transformer_layer_forward.1
$region0: #{transformer_layer_forward.1}
  #allocation0 [shape = 'u32[]', space=smem, size = 0x4, offset = 0x4, fixed_abs, tag = 'smem constant byte address 0x4 - core index']
  #allocation1 [shape = 'u32[144,128]{1,0:T(1,128)}', space=vmem, size = 0x12000, scoped, tag = 'internal scratch']
  %s0 = inlined_call_operand.vmem [shape: f32[2,8,32], index: 0, kind: input, shape index: {}]
  %s1 = inlined_call_operand.vmem [shape: f32[32,96], index: 1, kind: input, shape index: {}]
  %s2 = inlined_call_operand.vmem [shape: f32[1,96], index: 2, kind: input, shape index: {}]
  %s3 = inlined_call_operand.vmem [shape: f32[32,32], index: 3, kind: input, shape index: {}]
  %s4 = inlined_call_operand.vmem [shape: f32[1,32], index: 4, kind: input, shape index: {}]
  %s5 = inlined_call_operand.vmem [shape: f32[32,32], index: 5, kind: input, shape index: {}]
  %s6 = inlined_call_operand.vmem [shape: f32[2,8,32], index: 6, kind: output, shape index: {}]
  %s7 = sld [smem:[#allocation0]]
  $region57: #{transformer_layer_forward.1} parent=0
    _
  %s9 = ssub.s32 1, %s7
  %s10 = scalar_select 0, %s9, %s7
  loop: start=0, step=1, limit=4
  $region2: #{transformer_layer_forward.1} parent=0 // loop_pre_header
    _
  $region3: #{transformer_layer_forward.1} parent=0 // loop_header
    %s12 = sphi 0, %s16
    %p13 = scmp.ge.s32.totalorder %s12, 4
    %s22 = sphi 0, %s24
    %s25 = sphi 0, %s22
    %s26 = sphi 0, %s25
    %s42 = sphi 0, %s26
    %s46 = sphi 0, %s46
    %s48 = sphi 0, %s46
    %s49 = sphi 0, %s48
    %s63 = sphi 0, %s49
    %s67 = sphi 0, %s67
    %s69 = sphi 0, %s67
    %s70 = sphi 0, %s69
    %s84 = sphi 0, %s70
    %s88 = sphi 0, %s88
    %s90 = sphi 0, %s88
    %s91 = sphi 0, %s90
    %s105 = sphi 0, %s91
    %s109 = sphi 0, %s109
    %s111 = sphi 0, %s109
    %s112 = sphi 0, %s111
    %s126 = sphi 0, %s112
    %s130 = sphi 0, %s130
    %s132 = sphi 0, %s130
    %s133 = sphi 0, %s132
    %s147 = sphi 0, %s133
    %s153 = sphi 0, %s155
    %s156 = sphi 0, %s153
    %s157 = sphi 0, %s156
    %s173 = sphi 0, %s157
  $region4: #{transformer_layer_forward.1} parent=0 // loop_header_branch
    %15 = sbr.rel (%p13) target = $region8
  $region5: #{transformer_layer_forward.1} parent=0 // loop_body
    %s17 = ssub.s32 %s12, 1
    %s18 = ssub.s32 %s12, 2
    %s19 = sadd.s32 %s12, 1
    %s20 = ssub.s32 %s12, %s19
    %p21 = scmp.eq.s32.totalorder %s20, 0
    %s23 = sadd.s32 %s22, 1
    %s24 = scalar_select %p21, %s22, %s23
    %p27 = pneg %p21
    %p28 = scmp.eq.s32.totalorder %s12, 1
    %p29 = por %p27, %p28
    %p30 = scmp.ne.s32.totalorder %s22, %s25
    %p31 = scmp.eq.s32.totalorder %s12, 0
    %p32 = por %p30, %p31
    %p33 = scmp.ne.s32.totalorder %s22, %s25
    %p34 = scmp.eq.s32.totalorder %s17, 1
    %p35 = por %p33, %p34
    %p36 = scmp.ne.s32.totalorder %s25, %s26
    %p37 = scmp.eq.s32.totalorder %s17, 0
    %p38 = por %p36, %p37
    %p39 = scmp.ne.s32.totalorder %s25, %s26
    %p40 = scmp.eq.s32.totalorder %s18, 1
    %p41 = por %p39, %p40
    %p43 = scmp.ne.s32.totalorder %s26, %s42
    %p44 = scmp.eq.s32.totalorder %s18, 0
    %p45 = por %p43, %p44
    %s47 = sadd.s32 %s46, 1
    %p50 = scmp.eq.s32.totalorder %s12, 1
    %p51 = scmp.ne.s32.totalorder %s46, %s48
    %p52 = scmp.eq.s32.totalorder %s12, 0
    %p53 = por %p51, %p52
    %p54 = scmp.ne.s32.totalorder %s46, %s48
    %p55 = scmp.eq.s32.totalorder %s17, 1
    %p56 = por %p54, %p55
    %p57 = scmp.ne.s32.totalorder %s48, %s49
    %p58 = scmp.eq.s32.totalorder %s17, 0
    %p59 = por %p57, %p58
    %p60 = scmp.ne.s32.totalorder %s48, %s49
    %p61 = scmp.eq.s32.totalorder %s18, 1
    %p62 = por %p60, %p61
    %p64 = scmp.ne.s32.totalorder %s49, %s63
    %p65 = scmp.eq.s32.totalorder %s18, 0
    %p66 = por %p64, %p65
    %s68 = sadd.s32 %s67, 1
    %p71 = scmp.eq.s32.totalorder %s12, 1
    %p72 = scmp.ne.s32.totalorder %s67, %s69
    %p73 = scmp.eq.s32.totalorder %s12, 0
    %p74 = por %p72, %p73
    %p75 = scmp.ne.s32.totalorder %s67, %s69
    %p76 = scmp.eq.s32.totalorder %s17, 1
    %p77 = por %p75, %p76
    %p78 = scmp.ne.s32.totalorder %s69, %s70
    %p79 = scmp.eq.s32.totalorder %s17, 0
    %p80 = por %p78, %p79
    %p81 = scmp.ne.s32.totalorder %s69, %s70
    %p82 = scmp.eq.s32.totalorder %s18, 1
    %p83 = por %p81, %p82
    %p85 = scmp.ne.s32.totalorder %s70, %s84
    %p86 = scmp.eq.s32.totalorder %s18, 0
    %p87 = por %p85, %p86
    %s89 = sadd.s32 %s88, 1
    %p92 = scmp.eq.s32.totalorder %s12, 1
    %p93 = scmp.ne.s32.totalorder %s88, %s90
    %p94 = scmp.eq.s32.totalorder %s12, 0
    %p95 = por %p93, %p94
    %p96 = scmp.ne.s32.totalorder %s88, %s90
    %p97 = scmp.eq.s32.totalorder %s17, 1
    %p98 = por %p96, %p97
    %p99 = scmp.ne.s32.totalorder %s90, %s91
    %p100 = scmp.eq.s32.totalorder %s17, 0
    %p101 = por %p99, %p100
    %p102 = scmp.ne.s32.totalorder %s90, %s91
    %p103 = scmp.eq.s32.totalorder %s18, 1
    %p104 = por %p102, %p103
    %p106 = scmp.ne.s32.totalorder %s91, %s105
    %p107 = scmp.eq.s32.totalorder %s18, 0
    %p108 = por %p106, %p107
    %s110 = sadd.s32 %s109, 1
    %p113 = scmp.eq.s32.totalorder %s12, 1
    %p114 = scmp.ne.s32.totalorder %s109, %s111
    %p115 = scmp.eq.s32.totalorder %s12, 0
    %p116 = por %p114, %p115
    %p117 = scmp.ne.s32.totalorder %s109, %s111
    %p118 = scmp.eq.s32.totalorder %s17, 1
    %p119 = por %p117, %p118
    %p120 = scmp.ne.s32.totalorder %s111, %s112
    %p121 = scmp.eq.s32.totalorder %s17, 0
    %p122 = por %p120, %p121
    %p123 = scmp.ne.s32.totalorder %s111, %s112
    %p124 = scmp.eq.s32.totalorder %s18, 1
    %p125 = por %p123, %p124
    %p127 = scmp.ne.s32.totalorder %s112, %s126
    %p128 = scmp.eq.s32.totalorder %s18, 0
    %p129 = por %p127, %p128
    %s131 = sadd.s32 %s130, 1
    %p134 = scmp.eq.s32.totalorder %s12, 1
    %p135 = scmp.ne.s32.totalorder %s130, %s132
    %p136 = scmp.eq.s32.totalorder %s12, 0
    %p137 = por %p135, %p136
    %p138 = scmp.ne.s32.totalorder %s130, %s132
    %p139 = scmp.eq.s32.totalorder %s17, 1
    %p140 = por %p138, %p139
    %p141 = scmp.ne.s32.totalorder %s132, %s133
    %p142 = scmp.eq.s32.totalorder %s17, 0
    %p143 = por %p141, %p142
    %p144 = scmp.ne.s32.totalorder %s132, %s133
    %p145 = scmp.eq.s32.totalorder %s18, 1
    %p146 = por %p144, %p145
    %p148 = scmp.ne.s32.totalorder %s133, %s147
    %p149 = scmp.eq.s32.totalorder %s18, 0
    %p150 = por %p148, %p149
    %s151 = ssub.s32 %s12, %s19
    %p152 = scmp.eq.s32.totalorder %s151, 0
    %s154 = sadd.s32 %s153, 1
    %s155 = scalar_select %p152, %s153, %s154
    %p158 = pneg %p152
    %p159 = scmp.eq.s32.totalorder %s12, 1
    %p160 = por %p158, %p159
    %p161 = scmp.ne.s32.totalorder %s153, %s156
    %p162 = scmp.eq.s32.totalorder %s12, 0
    %p163 = por %p161, %p162
    %p164 = scmp.ne.s32.totalorder %s153, %s156
    %p165 = scmp.eq.s32.totalorder %s17, 1
    %p166 = por %p164, %p165
    %p167 = scmp.ne.s32.totalorder %s156, %s157
    %p168 = scmp.eq.s32.totalorder %s17, 0
    %p169 = por %p167, %p168
    %p170 = scmp.ne.s32.totalorder %s156, %s157
    %p171 = scmp.eq.s32.totalorder %s18, 1
    %p172 = por %p170, %p171
    %p174 = scmp.ne.s32.totalorder %s157, %s173
    %p175 = scmp.eq.s32.totalorder %s18, 0
    %p176 = por %p174, %p175
    %p177 = scmp.le.s32.totalorder 1, %s12
    %p178 = scmp.lt.s32.totalorder %s12, 3
    %p179 = pnand %p177, %p178
    %p180 = pneg %p179
    // Predicated region
    $region9: #{transformer_layer_forward.1} parent=5 // pred_check
      _
    $region10: #{transformer_layer_forward.1} parent=5 // pred_check_branch
      %182 = sbr.rel (%p179) target = $region12
    $region11: #{transformer_layer_forward.1} parent=5 // pred_region
      %s183 = ssub.s32 %s12, 1
      // Predicated region
      $region13: #{transformer_layer_forward.1} parent=11 // pred_check
        %p184 = pneg %p59
      $region14: #{transformer_layer_forward.1} parent=11 // pred_check_branch
        %186 = sbr.rel (%p184) target = $region16
      $region15: #{transformer_layer_forward.1} parent=11 // pred_region
        _
      $region16: #{transformer_layer_forward.1} parent=11 // pred_fallthru
        _
      // Predicated region
      $region17: #{transformer_layer_forward.1} parent=11 // pred_check
        %p187 = pneg %p80
      $region18: #{transformer_layer_forward.1} parent=11 // pred_check_branch
        %189 = sbr.rel (%p187) target = $region20
      $region19: #{transformer_layer_forward.1} parent=11 // pred_region
        _
      $region20: #{transformer_layer_forward.1} parent=11 // pred_fallthru
        _
      // Predicated region
      $region21: #{transformer_layer_forward.1} parent=11 // pred_check
        %p190 = pneg %p101
      $region22: #{transformer_layer_forward.1} parent=11 // pred_check_branch
        %192 = sbr.rel (%p190) target = $region24
      $region23: #{transformer_layer_forward.1} parent=11 // pred_region
        _
      $region24: #{transformer_layer_forward.1} parent=11 // pred_fallthru
        _
      // Predicated region
      $region25: #{transformer_layer_forward.1} parent=11 // pred_check
        %p193 = pneg %p122
      $region26: #{transformer_layer_forward.1} parent=11 // pred_check_branch
        %195 = sbr.rel (%p193) target = $region28
      $region27: #{transformer_layer_forward.1} parent=11 // pred_region
        _
      $region28: #{transformer_layer_forward.1} parent=11 // pred_fallthru
        _
      // Predicated region
      $region29: #{transformer_layer_forward.1} parent=11 // pred_check
        %p196 = pneg %p143
      $region30: #{transformer_layer_forward.1} parent=11 // pred_check_branch
        %198 = sbr.rel (%p196) target = $region32
      $region31: #{transformer_layer_forward.1} parent=11 // pred_region
        _
      $region32: #{transformer_layer_forward.1} parent=11 // pred_fallthru
        _
    $region12: #{transformer_layer_forward.1} parent=5 // pred_fallthru
      _
    %p199 = scmp.lt.s32.totalorder %s12, 2
    // Predicated region
    $region33: #{transformer_layer_forward.1} parent=5 // pred_check
      %p200 = pneg %p199
    $region34: #{transformer_layer_forward.1} parent=5 // pred_check_branch
      %202 = sbr.rel (%p200) target = $region36
    $region35: #{transformer_layer_forward.1} parent=5 // pred_region
      // Predicated region
      $region37: #{transformer_layer_forward.1} parent=35 // pred_check
        %p203 = pneg %p32
      $region38: #{transformer_layer_forward.1} parent=35 // pred_check_branch
        %205 = sbr.rel (%p203) target = $region40
      $region39: #{transformer_layer_forward.1} parent=35 // pred_region
        %p206 = scmp.lt.s32.totalorder %s12, 1
        %s207 = scalar_select %p206, %s12, 1
        %s208 = smul.addr %s207, 8
        %s209 = scalar_lea.vmem %s0, %s208
      $region40: #{transformer_layer_forward.1} parent=35 // pred_fallthru
        _
    $region36: #{transformer_layer_forward.1} parent=5 // pred_fallthru
      _
    %p210 = scmp.le.s32.totalorder 1, %s12
    %p211 = scmp.lt.s32.totalorder %s12, 3
    %p212 = pnand %p210, %p211
    %p213 = pneg %p212
    // Predicated region
    $region41: #{transformer_layer_forward.1} parent=5 // pred_check
      _
    $region42: #{transformer_layer_forward.1} parent=5 // pred_check_branch
      %215 = sbr.rel (%p212) target = $region44
    $region43: #{transformer_layer_forward.1} parent=5 // pred_region
      %s216 = ssub.s32 %s12, 1
      %p217 = scmp.lt.s32.totalorder %s17, 1
      %s218 = scalar_select %p217, %s17, 1
      %s219 = smul.addr %s218, 8
      %s220 = scalar_lea.vmem %s0, %s219
      %p221 = pneg %p38
      %p222 = pneg %p35
      %p223 = pneg %p59
      %p224 = pneg %p56
      %p225 = pneg %p80
      %p226 = pneg %p77
      %p227 = pneg %p101
      %p228 = pneg %p98
      %p229 = pneg %p122
      %p230 = pneg %p119
      %p231 = pneg %p143
      %p232 = pneg %p140
      %p233 = pneg %p169
      %p234 = pneg %p166
      %p235 = scmp.lt.s32.totalorder %s17, 1
      %s236 = scalar_select %p235, %s17, 1
      %s237 = smul.addr %s236, 8
      %s238 = scalar_lea.vmem %s6, %s237
      %p239 = scmp.lt.s32.totalorder %s17, 1
      %s240 = scalar_select %p239, %s17, 1
      %s241 = smul.addr %s240, 8
      %s242 = scalar_lea.vmem %s0, %s241
      %p243 = scmp.lt.s32.totalorder %s17, 1
      %s244 = scalar_select %p243, %s17, 1
      %s245 = smul.addr %s244, 8
      %s246 = scalar_lea.vmem %s6, %s245
      %v247 = vld [vmem:[%s242] sm:$0xff]
      %v248 = vld [vmem:[%s1] sm:$0xff]
      %v249 = vld [vmem:[%s1 + $0x8] sm:$0xff]
      %v250 = vld [vmem:[%s1 + $0x10] sm:$0xff]
      %v251 = vld [vmem:[%s1 + $0x18] sm:$0xff]
      %v252 = vld [vmem:[%s2] sm:$0x1]
      %v254 = vlaneseq
      %v255 = vshrl.u32 %v254, 7
      %v256 = vsub.s32 0, %v255
      %v257 = vrot.slane %v252, %v256
      %vm259 = vcmask 261120
      %v261 = vsel %vm259, %v247, 0
      %263 = vmatprep.subr.mxu0 0.0
      %264 = vmatpush1.msra.mxu0 %v248
      %265 = vmatprep.subr.mxu0 0.0
      %266 = vmatpush1.msra.mxu0 %v249
      %267 = vmatprep.subr.mxu0 0.0
      %268 = vmatpush1.msra.mxu0 %v250
      %269 = vmatprep.subr.mxu0 0.0
      %270 = vmatpush1.msra.mxu0 %v251
      %271 = vmatprep.subr.mxu0 0.0
      %272 = vmatpush1.msra.mxu0 0.0
      %273 = vmatprep.subr.mxu0 0.0
      %274 = vmatpush1.msra.mxu0 0.0
      %275 = vmatprep.subr.mxu0 0.0
      %276 = vmatpush1.msra.mxu0 0.0
      %277 = vmatprep.subr.mxu0 0.0
      %278 = vmatpush1.msra.mxu0 0.0
      %279 = vmatprep.subr.mxu0 0.0
      %280 = vmatpush1.msra.mxu0 0.0
      %281 = vmatprep.subr.mxu0 0.0
      %282 = vmatpush1.msra.mxu0 0.0
      %283 = vmatprep.subr.mxu0 0.0
      %284 = vmatpush1.msra.mxu0 0.0
      %285 = vmatprep.subr.mxu0 0.0
      %286 = vmatpush1.msra.mxu0 0.0
      %287 = vmatprep.subr.mxu0 0.0
      %288 = vmatpush1.msra.mxu0 0.0
      %289 = vmatprep.subr.mxu0 0.0
      %290 = vmatpush1.msra.mxu0 0.0
      %291 = vmatprep.subr.mxu0 0.0
      %292 = vmatpush1.msra.mxu0 0.0
      %293 = vmatprep.subr.mxu0 0.0
      %294 = vmatpush1.msra.mxu0 0.0
      %295 = vmatprep.subr.mxu0 0.0
      %296 = vmatpush1.msra.mxu0 0.0
      %297 = vmatprep.subr.mxu0 0.0
      %298 = vmatpush1.msra.mxu0 0.0
      %299 = vmatprep.subr.mxu0 0.0
      %300 = vmatpush1.msra.mxu0 0.0
      %301 = vmatprep.subr.mxu0 0.0
      %302 = vmatpush1.msra.mxu0 0.0
      %303 = vmatprep.subr.mxu0 0.0
      %304 = vmatpush1.msra.mxu0 0.0
      %305 = vmatprep.subr.mxu0 0.0
      %306 = vmatpush1.msra.mxu0 0.0
      %307 = vmatprep.subr.mxu0 0.0
      %308 = vmatpush1.msra.mxu0 0.0
      %309 = vmatprep.subr.mxu0 0.0
      %310 = vmatpush1.msra.mxu0 0.0
      %311 = vmatprep.subr.mxu0 0.0
      %312 = vmatpush1.msra.mxu0 0.0
      %313 = vmatprep.subr.mxu0 0.0
      %314 = vmatpush1.msra.mxu0 0.0
      %315 = vmatprep.subr.mxu0 0.0
      %316 = vmatpush1.msra.mxu0 0.0
      %317 = vmatprep.subr.mxu0 0.0
      %318 = vmatpush1.msra.mxu0 0.0
      %319 = vmatprep.subr.mxu0 0.0
      %320 = vmatpush1.msra.mxu0 0.0
      %321 = vmatprep.subr.mxu0 0.0
      %322 = vmatpush1.msra.mxu0 0.0
      %323 = vmatprep.subr.mxu0 0.0
      %324 = vmatpush1.msra.mxu0 0.0
      %325 = vmatprep.subr.mxu0 0.0
      %326 = vmatpush1.msra.mxu0 0.0
      %327 = vmatprep.mubr.f32.mxu0 0.0
      %328 = vmatmul.mubr.f32.gmra.mrb[0].mxu0 %v261
      %v329 = vpop.f32.mrb[0].mxu0
      %v330 = vadd.f32 %v257, %v329
      %v331 = vpop.f32.mrb[0].mxu0
      %332 = vdwg.mxu0
      %v333 = vmul.f32 %v330, 0.35355338
      %335 = vrot.lane.b32.xlu0 %v330, 96
      %v336 = vpop.permute.xlu0 %335
      %vm337 = vcmask 64512
      %v339 = vsel %vm337, %v333, 0
      %v341 = vsel %vm337, %v336, 0
      %343 = vmatprep.subr.mxu0 0.0
      %344 = vmatpush1.xpose.msra.mxu0 %v341
      %345 = vmatprep.subr.mxu0 0.0
      %346 = vmatpush1.xpose.msra.mxu0 0.0
      %347 = vmatprep.subr.mxu0 0.0
      %348 = vmatpush1.xpose.msra.mxu0 0.0
      %349 = vmatprep.subr.mxu0 0.0
      %350 = vmatpush1.xpose.msra.mxu0 0.0
      %351 = vmatprep.subr.mxu0 0.0
      %352 = vmatpush1.xpose.msra.mxu0 0.0
      %353 = vmatprep.subr.mxu0 0.0
      %354 = vmatpush1.xpose.msra.mxu0 0.0
      %355 = vmatprep.subr.mxu0 0.0
      %356 = vmatpush1.xpose.msra.mxu0 0.0
      %357 = vmatprep.subr.mxu0 0.0
      %358 = vmatpush1.xpose.msra.mxu0 0.0
      %359 = vmatprep.subr.mxu0 0.0
      %360 = vmatpush1.xpose.msra.mxu0 0.0
      %361 = vmatprep.subr.mxu0 0.0
      %362 = vmatpush1.xpose.msra.mxu0 0.0
      %363 = vmatprep.subr.mxu0 0.0
      %364 = vmatpush1.xpose.msra.mxu0 0.0
      %365 = vmatprep.subr.mxu0 0.0
      %366 = vmatpush1.xpose.msra.mxu0 0.0
      %367 = vmatprep.subr.mxu0 0.0
      %368 = vmatpush1.xpose.msra.mxu0 0.0
      %369 = vmatprep.subr.mxu0 0.0
      %370 = vmatpush1.xpose.msra.mxu0 0.0
      %371 = vmatprep.subr.mxu0 0.0
      %372 = vmatpush1.xpose.msra.mxu0 0.0
      %373 = vmatprep.subr.mxu0 0.0
      %374 = vmatpush1.xpose.msra.mxu0 0.0
      %375 = vmatprep.subr.mxu0 0.0
      %376 = vmatpush1.xpose.msra.mxu0 0.0
      %377 = vmatprep.subr.mxu0 0.0
      %378 = vmatpush1.xpose.msra.mxu0 0.0
      %379 = vmatprep.subr.mxu0 0.0
      %380 = vmatpush1.xpose.msra.mxu0 0.0
      %381 = vmatprep.subr.mxu0 0.0
      %382 = vmatpush1.xpose.msra.mxu0 0.0
      %383 = vmatprep.subr.mxu0 0.0
      %384 = vmatpush1.xpose.msra.mxu0 0.0
      %385 = vmatprep.subr.mxu0 0.0
      %386 = vmatpush1.xpose.msra.mxu0 0.0
      %387 = vmatprep.subr.mxu0 0.0
      %388 = vmatpush1.xpose.msra.mxu0 0.0
      %389 = vmatprep.subr.mxu0 0.0
      %390 = vmatpush1.xpose.msra.mxu0 0.0
      %391 = vmatprep.subr.mxu0 0.0
      %392 = vmatpush1.xpose.msra.mxu0 0.0
      %393 = vmatprep.subr.mxu0 0.0
      %394 = vmatpush1.xpose.msra.mxu0 0.0
      %395 = vmatprep.subr.mxu0 0.0
      %396 = vmatpush1.xpose.msra.mxu0 0.0
      %397 = vmatprep.subr.mxu0 0.0
      %398 = vmatpush1.xpose.msra.mxu0 0.0
      %399 = vmatprep.subr.mxu0 0.0
      %400 = vmatpush1.xpose.msra.mxu0 0.0
      %401 = vmatprep.subr.mxu0 0.0
      %402 = vmatpush1.xpose.msra.mxu0 0.0
      %403 = vmatprep.subr.mxu0 0.0
      %404 = vmatpush1.xpose.msra.mxu0 0.0
      %405 = vmatprep.subr.mxu0 0.0
      %406 = vmatpush1.xpose.msra.mxu0 0.0
      %407 = vmatprep.mubr.f32.mxu0 0.0
      %408 = vmatmul.mubr.f32.gmra.mrb[0].mxu0 %v339
      %v409 = vpop.f32.mrb[0].mxu0
      %v410 = vadd.f32 0.0, %v409
      %v411 = vpop.f32.mrb[0].mxu0
      %412 = vdwg.mxu0
      %v413 = vsel %vm337, %v410, -inf
      %414 = vmax.xlane.f32.xlu0 %v413
      %v415 = vpop.xlane.xlu0 %414
      %v416 = vsub.f32 %v410, %v415
      %v417 = vmul.f32 %v416, 1.442695
      %v418 = vpow.pop %v417
      %v419 = vsel %vm337, %v418, 0.0
      %420 = vadd.xlane.f32.xlu0 %v419
      %v421 = vpop.xlane.xlu0 %420
      %v422 = vrcp.pop %v421
      %v423 = vmul.f32 %v418, %v422
      %424 = vrot.lane.b32.xlu0 %v330, 64
      %v425 = vpop.permute.xlu0 %424
      %v428 = vsel %vm337, %v423, 0
      %430 = vmatprep.subr.mxu0 0.0
      %431 = vmatpush1.msra.mxu0 %v425
      %432 = vmatprep.subr.mxu0 0.0
      %433 = vmatpush1.msra.mxu0 0.0
      %434 = vmatprep.subr.mxu0 0.0
      %435 = vmatpush1.msra.mxu0 0.0
      %436 = vmatprep.subr.mxu0 0.0
      %437 = vmatpush1.msra.mxu0 0.0
      %438 = vmatprep.subr.mxu0 0.0
      %439 = vmatpush1.msra.mxu0 0.0
      %440 = vmatprep.subr.mxu0 0.0
      %441 = vmatpush1.msra.mxu0 0.0
      %442 = vmatprep.subr.mxu0 0.0
      %443 = vmatpush1.msra.mxu0 0.0
      %444 = vmatprep.subr.mxu0 0.0
      %445 = vmatpush1.msra.mxu0 0.0
      %446 = vmatprep.subr.mxu0 0.0
      %447 = vmatpush1.msra.mxu0 0.0
      %448 = vmatprep.subr.mxu0 0.0
      %449 = vmatpush1.msra.mxu0 0.0
      %450 = vmatprep.subr.mxu0 0.0
      %451 = vmatpush1.msra.mxu0 0.0
      %452 = vmatprep.subr.mxu0 0.0
      %453 = vmatpush1.msra.mxu0 0.0
      %454 = vmatprep.subr.mxu0 0.0
      %455 = vmatpush1.msra.mxu0 0.0
      %456 = vmatprep.subr.mxu0 0.0
      %457 = vmatpush1.msra.mxu0 0.0
      %458 = vmatprep.subr.mxu0 0.0
      %459 = vmatpush1.msra.mxu0 0.0
      %460 = vmatprep.subr.mxu0 0.0
      %461 = vmatpush1.msra.mxu0 0.0
      %462 = vmatprep.subr.mxu0 0.0
      %463 = vmatpush1.msra.mxu0 0.0
      %464 = vmatprep.subr.mxu0 0.0
      %465 = vmatpush1.msra.mxu0 0.0
      %466 = vmatprep.subr.mxu0 0.0
      %467 = vmatpush1.msra.mxu0 0.0
      %468 = vmatprep.subr.mxu0 0.0
      %469 = vmatpush1.msra.mxu0 0.0
      %470 = vmatprep.subr.mxu0 0.0
      %471 = vmatpush1.msra.mxu0 0.0
      %472 = vmatprep.subr.mxu0 0.0
      %473 = vmatpush1.msra.mxu0 0.0
      %474 = vmatprep.subr.mxu0 0.0
      %475 = vmatpush1.msra.mxu0 0.0
      %476 = vmatprep.subr.mxu0 0.0
      %477 = vmatpush1.msra.mxu0 0.0
      %478 = vmatprep.subr.mxu0 0.0
      %479 = vmatpush1.msra.mxu0 0.0
      %480 = vmatprep.subr.mxu0 0.0
      %481 = vmatpush1.msra.mxu0 0.0
      %482 = vmatprep.subr.mxu0 0.0
      %483 = vmatpush1.msra.mxu0 0.0
      %484 = vmatprep.subr.mxu0 0.0
      %485 = vmatpush1.msra.mxu0 0.0
      %486 = vmatprep.subr.mxu0 0.0
      %487 = vmatpush1.msra.mxu0 0.0
      %488 = vmatprep.subr.mxu0 0.0
      %489 = vmatpush1.msra.mxu0 0.0
      %490 = vmatprep.subr.mxu0 0.0
      %491 = vmatpush1.msra.mxu0 0.0
      %492 = vmatprep.subr.mxu0 0.0
      %493 = vmatpush1.msra.mxu0 0.0
      %494 = vmatprep.mubr.f32.mxu0 0.0
      %495 = vmatmul.mubr.f32.gmra.mrb[0].mxu0 %v428
      %v496 = vpop.f32.mrb[0].mxu0
      %v497 = vadd.f32 0.0, %v496
      %v498 = vpop.f32.mrb[0].mxu0
      %499 = vdwg.mxu0
      %500 = vrot.lane.b32.xlu0 %v333, 120
      %v501 = vpop.permute.xlu0 %500
      %502 = vrot.lane.b32.xlu0 %v330, 88
      %v503 = vpop.permute.xlu0 %502
      %v504 = vsel %vm337, %v501, 0
      %v506 = vsel %vm337, %v503, 0
      %508 = vmatprep.subr.mxu0 0.0
      %509 = vmatpush1.xpose.msra.mxu0 %v506
      %510 = vmatprep.subr.mxu0 0.0
      %511 = vmatpush1.xpose.msra.mxu0 0.0
      %512 = vmatprep.subr.mxu0 0.0
      %513 = vmatpush1.xpose.msra.mxu0 0.0
      %514 = vmatprep.subr.mxu0 0.0
      %515 = vmatpush1.xpose.msra.mxu0 0.0
      %516 = vmatprep.subr.mxu0 0.0
      %517 = vmatpush1.xpose.msra.mxu0 0.0
      %518 = vmatprep.subr.mxu0 0.0
      %519 = vmatpush1.xpose.msra.mxu0 0.0
      %520 = vmatprep.subr.mxu0 0.0
      %521 = vmatpush1.xpose.msra.mxu0 0.0
      %522 = vmatprep.subr.mxu0 0.0
      %523 = vmatpush1.xpose.msra.mxu0 0.0
      %524 = vmatprep.subr.mxu0 0.0
      %525 = vmatpush1.xpose.msra.mxu0 0.0
      %526 = vmatprep.subr.mxu0 0.0
      %527 = vmatpush1.xpose.msra.mxu0 0.0
      %528 = vmatprep.subr.mxu0 0.0
      %529 = vmatpush1.xpose.msra.mxu0 0.0
      %530 = vmatprep.subr.mxu0 0.0
      %531 = vmatpush1.xpose.msra.mxu0 0.0
      %532 = vmatprep.subr.mxu0 0.0
      %533 = vmatpush1.xpose.msra.mxu0 0.0
      %534 = vmatprep.subr.mxu0 0.0
      %535 = vmatpush1.xpose.msra.mxu0 0.0
      %536 = vmatprep.subr.mxu0 0.0
      %537 = vmatpush1.xpose.msra.mxu0 0.0
      %538 = vmatprep.subr.mxu0 0.0
      %539 = vmatpush1.xpose.msra.mxu0 0.0
      %540 = vmatprep.subr.mxu0 0.0
      %541 = vmatpush1.xpose.msra.mxu0 0.0
      %542 = vmatprep.subr.mxu0 0.0
      %543 = vmatpush1.xpose.msra.mxu0 0.0
      %544 = vmatprep.subr.mxu0 0.0
      %545 = vmatpush1.xpose.msra.mxu0 0.0
      %546 = vmatprep.subr.mxu0 0.0
      %547 = vmatpush1.xpose.msra.mxu0 0.0
      %548 = vmatprep.subr.mxu0 0.0
      %549 = vmatpush1.xpose.msra.mxu0 0.0
      %550 = vmatprep.subr.mxu0 0.0
      %551 = vmatpush1.xpose.msra.mxu0 0.0
      %552 = vmatprep.subr.mxu0 0.0
      %553 = vmatpush1.xpose.msra.mxu0 0.0
      %554 = vmatprep.subr.mxu0 0.0
      %555 = vmatpush1.xpose.msra.mxu0 0.0
      %556 = vmatprep.subr.mxu0 0.0
      %557 = vmatpush1.xpose.msra.mxu0 0.0
      %558 = vmatprep.subr.mxu0 0.0
      %559 = vmatpush1.xpose.msra.mxu0 0.0
      %560 = vmatprep.subr.mxu0 0.0
      %561 = vmatpush1.xpose.msra.mxu0 0.0
      %562 = vmatprep.subr.mxu0 0.0
      %563 = vmatpush1.xpose.msra.mxu0 0.0
      %564 = vmatprep.subr.mxu0 0.0
      %565 = vmatpush1.xpose.msra.mxu0 0.0
      %566 = vmatprep.subr.mxu0 0.0
      %567 = vmatpush1.xpose.msra.mxu0 0.0
      %568 = vmatprep.subr.mxu0 0.0
      %569 = vmatpush1.xpose.msra.mxu0 0.0
      %570 = vmatprep.subr.mxu0 0.0
      %571 = vmatpush1.xpose.msra.mxu0 0.0
      %572 = vmatprep.mubr.f32.mxu0 0.0
      %573 = vmatmul.mubr.f32.gmra.mrb[0].mxu0 %v504
      %v574 = vpop.f32.mrb[0].mxu0
      %v575 = vadd.f32 0.0, %v574
      %v576 = vpop.f32.mrb[0].mxu0
      %577 = vdwg.mxu0
      %v578 = vsel %vm337, %v575, -inf
      %579 = vmax.xlane.f32.xlu0 %v578
      %v580 = vpop.xlane.xlu0 %579
      %v581 = vsub.f32 %v575, %v580
      %v582 = vmul.f32 %v581, 1.442695
      %v583 = vpow.pop %v582
      %v584 = vsel %vm337, %v583, 0.0
      %585 = vadd.xlane.f32.xlu0 %v584
      %v586 = vpop.xlane.xlu0 %585
      %v587 = vrcp.pop %v586
      %v588 = vmul.f32 %v583, %v587
      %589 = vrot.lane.b32.xlu0 %v330, 56
      %v590 = vpop.permute.xlu0 %589
      %v593 = vsel %vm337, %v588, 0
      %595 = vmatprep.subr.mxu0 0.0
      %596 = vmatpush1.msra.mxu0 %v590
      %597 = vmatprep.subr.mxu0 0.0
      %598 = vmatpush1.msra.mxu0 0.0
      %599 = vmatprep.subr.mxu0 0.0
      %600 = vmatpush1.msra.mxu0 0.0
      %601 = vmatprep.subr.mxu0 0.0
      %602 = vmatpush1.msra.mxu0 0.0
      %603 = vmatprep.subr.mxu0 0.0
      %604 = vmatpush1.msra.mxu0 0.0
      %605 = vmatprep.subr.mxu0 0.0
      %606 = vmatpush1.msra.mxu0 0.0
      %607 = vmatprep.subr.mxu0 0.0
      %608 = vmatpush1.msra.mxu0 0.0
      %609 = vmatprep.subr.mxu0 0.0
      %610 = vmatpush1.msra.mxu0 0.0
      %611 = vmatprep.subr.mxu0 0.0
      %612 = vmatpush1.msra.mxu0 0.0
      %613 = vmatprep.subr.mxu0 0.0
      %614 = vmatpush1.msra.mxu0 0.0
      %615 = vmatprep.subr.mxu0 0.0
      %616 = vmatpush1.msra.mxu0 0.0
      %617 = vmatprep.subr.mxu0 0.0
      %618 = vmatpush1.msra.mxu0 0.0
      %619 = vmatprep.subr.mxu0 0.0
      %620 = vmatpush1.msra.mxu0 0.0
      %621 = vmatprep.subr.mxu0 0.0
      %622 = vmatpush1.msra.mxu0 0.0
      %623 = vmatprep.subr.mxu0 0.0
      %624 = vmatpush1.msra.mxu0 0.0
      %625 = vmatprep.subr.mxu0 0.0
      %626 = vmatpush1.msra.mxu0 0.0
      %627 = vmatprep.subr.mxu0 0.0
      %628 = vmatpush1.msra.mxu0 0.0
      %629 = vmatprep.subr.mxu0 0.0
      %630 = vmatpush1.msra.mxu0 0.0
      %631 = vmatprep.subr.mxu0 0.0
      %632 = vmatpush1.msra.mxu0 0.0
      %633 = vmatprep.subr.mxu0 0.0
      %634 = vmatpush1.msra.mxu0 0.0
      %635 = vmatprep.subr.mxu0 0.0
      %636 = vmatpush1.msra.mxu0 0.0
      %637 = vmatprep.subr.mxu0 0.0
      %638 = vmatpush1.msra.mxu0 0.0
      %639 = vmatprep.subr.mxu0 0.0
      %640 = vmatpush1.msra.mxu0 0.0
      %641 = vmatprep.subr.mxu0 0.0
      %642 = vmatpush1.msra.mxu0 0.0
      %643 = vmatprep.subr.mxu0 0.0
      %644 = vmatpush1.msra.mxu0 0.0
      %645 = vmatprep.subr.mxu0 0.0
      %646 = vmatpush1.msra.mxu0 0.0
      %647 = vmatprep.subr.mxu0 0.0
      %648 = vmatpush1.msra.mxu0 0.0
      %649 = vmatprep.subr.mxu0 0.0
      %650 = vmatpush1.msra.mxu0 0.0
      %651 = vmatprep.subr.mxu0 0.0
      %652 = vmatpush1.msra.mxu0 0.0
      %653 = vmatprep.subr.mxu0 0.0
      %654 = vmatpush1.msra.mxu0 0.0
      %655 = vmatprep.subr.mxu0 0.0
      %656 = vmatpush1.msra.mxu0 0.0
      %657 = vmatprep.subr.mxu0 0.0
      %658 = vmatpush1.msra.mxu0 0.0
      %659 = vmatprep.mubr.f32.mxu0 0.0
      %660 = vmatmul.mubr.f32.gmra.mrb[0].mxu0 %v593
      %v661 = vpop.f32.mrb[0].mxu0
      %v662 = vadd.f32 0.0, %v661
      %v663 = vpop.f32.mrb[0].mxu0
      %664 = vdwg.mxu0
      %665 = vrot.lane.b32.xlu0 %v333, 112
      %v666 = vpop.permute.xlu0 %665
      %667 = vrot.lane.b32.xlu0 %v330, 80
      %v668 = vpop.permute.xlu0 %667
      %v669 = vsel %vm337, %v666, 0
      %v671 = vsel %vm337, %v668, 0
      %673 = vmatprep.subr.mxu0 0.0
      %674 = vmatpush1.xpose.msra.mxu0 %v671
      %675 = vmatprep.subr.mxu0 0.0
      %676 = vmatpush1.xpose.msra.mxu0 0.0
      %677 = vmatprep.subr.mxu0 0.0
      %678 = vmatpush1.xpose.msra.mxu0 0.0
      %679 = vmatprep.subr.mxu0 0.0
      %680 = vmatpush1.xpose.msra.mxu0 0.0
      %681 = vmatprep.subr.mxu0 0.0
      %682 = vmatpush1.xpose.msra.mxu0 0.0
      %683 = vmatprep.subr.mxu0 0.0
      %684 = vmatpush1.xpose.msra.mxu0 0.0
      %685 = vmatprep.subr.mxu0 0.0
      %686 = vmatpush1.xpose.msra.mxu0 0.0
      %687 = vmatprep.subr.mxu0 0.0
      %688 = vmatpush1.xpose.msra.mxu0 0.0
      %689 = vmatprep.subr.mxu0 0.0
      %690 = vmatpush1.xpose.msra.mxu0 0.0
      %691 = vmatprep.subr.mxu0 0.0
      %692 = vmatpush1.xpose.msra.mxu0 0.0
      %693 = vmatprep.subr.mxu0 0.0
      %694 = vmatpush1.xpose.msra.mxu0 0.0
      %695 = vmatprep.subr.mxu0 0.0
      %696 = vmatpush1.xpose.msra.mxu0 0.0
      %697 = vmatprep.subr.mxu0 0.0
      %698 = vmatpush1.xpose.msra.mxu0 0.0
      %699 = vmatprep.subr.mxu0 0.0
      %700 = vmatpush1.xpose.msra.mxu0 0.0
      %701 = vmatprep.subr.mxu0 0.0
      %702 = vmatpush1.xpose.msra.mxu0 0.0
      %703 = vmatprep.subr.mxu0 0.0
      %704 = vmatpush1.xpose.msra.mxu0 0.0
      %705 = vmatprep.subr.mxu0 0.0
      %706 = vmatpush1.xpose.msra.mxu0 0.0
      %707 = vmatprep.subr.mxu0 0.0
      %708 = vmatpush1.xpose.msra.mxu0 0.0
      %709 = vmatprep.subr.mxu0 0.0
      %710 = vmatpush1.xpose.msra.mxu0 0.0
      %711 = vmatprep.subr.mxu0 0.0
      %712 = vmatpush1.xpose.msra.mxu0 0.0
      %713 = vmatprep.subr.mxu0 0.0
      %714 = vmatpush1.xpose.msra.mxu0 0.0
      %715 = vmatprep.subr.mxu0 0.0
      %716 = vmatpush1.xpose.msra.mxu0 0.0
      %717 = vmatprep.subr.mxu0 0.0
      %718 = vmatpush1.xpose.msra.mxu0 0.0
      %719 = vmatprep.subr.mxu0 0.0
      %720 = vmatpush1.xpose.msra.mxu0 0.0
      %721 = vmatprep.subr.mxu0 0.0
      %722 = vmatpush1.xpose.msra.mxu0 0.0
      %723 = vmatprep.subr.mxu0 0.0
      %724 = vmatpush1.xpose.msra.mxu0 0.0
      %725 = vmatprep.subr.mxu0 0.0
      %726 = vmatpush1.xpose.msra.mxu0 0.0
      %727 = vmatprep.subr.mxu0 0.0
      %728 = vmatpush1.xpose.msra.mxu0 0.0
      %729 = vmatprep.subr.mxu0 0.0
      %730 = vmatpush1.xpose.msra.mxu0 0.0
      %731 = vmatprep.subr.mxu0 0.0
      %732 = vmatpush1.xpose.msra.mxu0 0.0
      %733 = vmatprep.subr.mxu0 0.0
      %734 = vmatpush1.xpose.msra.mxu0 0.0
      %735 = vmatprep.subr.mxu0 0.0
      %736 = vmatpush1.xpose.msra.mxu0 0.0
      %737 = vmatprep.mubr.f32.mxu0 0.0
      %738 = vmatmul.mubr.f32.gmra.mrb[0].mxu0 %v669
      %v739 = vpop.f32.mrb[0].mxu0
      %v740 = vadd.f32 0.0, %v739
      %v741 = vpop.f32.mrb[0].mxu0
      %742 = vdwg.mxu0
      %v743 = vsel %vm337, %v740, -inf
      %744 = vmax.xlane.f32.xlu0 %v743
      %v745 = vpop.xlane.xlu0 %744
      %v746 = vsub.f32 %v740, %v745
      %v747 = vmul.f32 %v746, 1.442695
      %v748 = vpow.pop %v747
      %v749 = vsel %vm337, %v748, 0.0
      %750 = vadd.xlane.f32.xlu0 %v749
      %v751 = vpop.xlane.xlu0 %750
      %v752 = vrcp.pop %v751
      %v753 = vmul.f32 %v748, %v752
      %754 = vrot.lane.b32.xlu0 %v330, 48
      %v755 = vpop.permute.xlu0 %754
      %v758 = vsel %vm337, %v753, 0
      %760 = vmatprep.subr.mxu0 0.0
      %761 = vmatpush1.msra.mxu0 %v755
      %762 = vmatprep.subr.mxu0 0.0
      %763 = vmatpush1.msra.mxu0 0.0
      %764 = vmatprep.subr.mxu0 0.0
      %765 = vmatpush1.msra.mxu0 0.0
      %766 = vmatprep.subr.mxu0 0.0
      %767 = vmatpush1.msra.mxu0 0.0
      %768 = vmatprep.subr.mxu0 0.0
      %769 = vmatpush1.msra.mxu0 0.0
      %770 = vmatprep.subr.mxu0 0.0
      %771 = vmatpush1.msra.mxu0 0.0
      %772 = vmatprep.subr.mxu0 0.0
      %773 = vmatpush1.msra.mxu0 0.0
      %774 = vmatprep.subr.mxu0 0.0
      %775 = vmatpush1.msra.mxu0 0.0
      %776 = vmatprep.subr.mxu0 0.0
      %777 = vmatpush1.msra.mxu0 0.0
      %778 = vmatprep.subr.mxu0 0.0
      %779 = vmatpush1.msra.mxu0 0.0
      %780 = vmatprep.subr.mxu0 0.0
      %781 = vmatpush1.msra.mxu0 0.0
      %782 = vmatprep.subr.mxu0 0.0
      %783 = vmatpush1.msra.mxu0 0.0
      %784 = vmatprep.subr.mxu0 0.0
      %785 = vmatpush1.msra.mxu0 0.0
      %786 = vmatprep.subr.mxu0 0.0
      %787 = vmatpush1.msra.mxu0 0.0
      %788 = vmatprep.subr.mxu0 0.0
      %789 = vmatpush1.msra.mxu0 0.0
      %790 = vmatprep.subr.mxu0 0.0
      %791 = vmatpush1.msra.mxu0 0.0
      %792 = vmatprep.subr.mxu0 0.0
      %793 = vmatpush1.msra.mxu0 0.0
      %794 = vmatprep.subr.mxu0 0.0
      %795 = vmatpush1.msra.mxu0 0.0
      %796 = vmatprep.subr.mxu0 0.0
      %797 = vmatpush1.msra.mxu0 0.0
      %798 = vmatprep.subr.mxu0 0.0
      %799 = vmatpush1.msra.mxu0 0.0
      %800 = vmatprep.subr.mxu0 0.0
      %801 = vmatpush1.msra.mxu0 0.0
      %802 = vmatprep.subr.mxu0 0.0
      %803 = vmatpush1.msra.mxu0 0.0
      %804 = vmatprep.subr.mxu0 0.0
      %805 = vmatpush1.msra.mxu0 0.0
      %806 = vmatprep.subr.mxu0 0.0
      %807 = vmatpush1.msra.mxu0 0.0
      %808 = vmatprep.subr.mxu0 0.0
      %809 = vmatpush1.msra.mxu0 0.0
      %810 = vmatprep.subr.mxu0 0.0
      %811 = vmatpush1.msra.mxu0 0.0
      %812 = vmatprep.subr.mxu0 0.0
      %813 = vmatpush1.msra.mxu0 0.0
      %814 = vmatprep.subr.mxu0 0.0
      %815 = vmatpush1.msra.mxu0 0.0
      %816 = vmatprep.subr.mxu0 0.0
      %817 = vmatpush1.msra.mxu0 0.0
      %818 = vmatprep.subr.mxu0 0.0
      %819 = vmatpush1.msra.mxu0 0.0
      %820 = vmatprep.subr.mxu0 0.0
      %821 = vmatpush1.msra.mxu0 0.0
      %822 = vmatprep.subr.mxu0 0.0
      %823 = vmatpush1.msra.mxu0 0.0
      %824 = vmatprep.mubr.f32.mxu0 0.0
      %825 = vmatmul.mubr.f32.gmra.mrb[0].mxu0 %v758
      %v826 = vpop.f32.mrb[0].mxu0
      %v827 = vadd.f32 0.0, %v826
      %v828 = vpop.f32.mrb[0].mxu0
      %829 = vdwg.mxu0
      %830 = vrot.lane.b32.xlu0 %v333, 104
      %v831 = vpop.permute.xlu0 %830
      %832 = vrot.lane.b32.xlu0 %v330, 72
      %v833 = vpop.permute.xlu0 %832
      %v834 = vsel %vm337, %v831, 0
      %v836 = vsel %vm337, %v833, 0
      %838 = vmatprep.subr.mxu0 0.0
      %839 = vmatpush1.xpose.msra.mxu0 %v836
      %840 = vmatprep.subr.mxu0 0.0
      %841 = vmatpush1.xpose.msra.mxu0 0.0
      %842 = vmatprep.subr.mxu0 0.0
      %843 = vmatpush1.xpose.msra.mxu0 0.0
      %844 = vmatprep.subr.mxu0 0.0
      %845 = vmatpush1.xpose.msra.mxu0 0.0
      %846 = vmatprep.subr.mxu0 0.0
      %847 = vmatpush1.xpose.msra.mxu0 0.0
      %848 = vmatprep.subr.mxu0 0.0
      %849 = vmatpush1.xpose.msra.mxu0 0.0
      %850 = vmatprep.subr.mxu0 0.0
      %851 = vmatpush1.xpose.msra.mxu0 0.0
      %852 = vmatprep.subr.mxu0 0.0
      %853 = vmatpush1.xpose.msra.mxu0 0.0
      %854 = vmatprep.subr.mxu0 0.0
      %855 = vmatpush1.xpose.msra.mxu0 0.0
      %856 = vmatprep.subr.mxu0 0.0
      %857 = vmatpush1.xpose.msra.mxu0 0.0
      %858 = vmatprep.subr.mxu0 0.0
      %859 = vmatpush1.xpose.msra.mxu0 0.0
      %860 = vmatprep.subr.mxu0 0.0
      %861 = vmatpush1.xpose.msra.mxu0 0.0
      %862 = vmatprep.subr.mxu0 0.0
      %863 = vmatpush1.xpose.msra.mxu0 0.0
      %864 = vmatprep.subr.mxu0 0.0
      %865 = vmatpush1.xpose.msra.mxu0 0.0
      %866 = vmatprep.subr.mxu0 0.0
      %867 = vmatpush1.xpose.msra.mxu0 0.0
      %868 = vmatprep.subr.mxu0 0.0
      %869 = vmatpush1.xpose.msra.mxu0 0.0
      %870 = vmatprep.subr.mxu0 0.0
      %871 = vmatpush1.xpose.msra.mxu0 0.0
      %872 = vmatprep.subr.mxu0 0.0
      %873 = vmatpush1.xpose.msra.mxu0 0.0
      %874 = vmatprep.subr.mxu0 0.0
      %875 = vmatpush1.xpose.msra.mxu0 0.0
      %876 = vmatprep.subr.mxu0 0.0
      %877 = vmatpush1.xpose.msra.mxu0 0.0
      %878 = vmatprep.subr.mxu0 0.0
      %879 = vmatpush1.xpose.msra.mxu0 0.0
      %880 = vmatprep.subr.mxu0 0.0
      %881 = vmatpush1.xpose.msra.mxu0 0.0
      %882 = vmatprep.subr.mxu0 0.0
      %883 = vmatpush1.xpose.msra.mxu0 0.0
      %884 = vmatprep.subr.mxu0 0.0
      %885 = vmatpush1.xpose.msra.mxu0 0.0
      %886 = vmatprep.subr.mxu0 0.0
      %887 = vmatpush1.xpose.msra.mxu0 0.0
      %888 = vmatprep.subr.mxu0 0.0
      %889 = vmatpush1.xpose.msra.mxu0 0.0
      %890 = vmatprep.subr.mxu0 0.0
      %891 = vmatpush1.xpose.msra.mxu0 0.0
      %892 = vmatprep.subr.mxu0 0.0
      %893 = vmatpush1.xpose.msra.mxu0 0.0
      %894 = vmatprep.subr.mxu0 0.0
      %895 = vmatpush1.xpose.msra.mxu0 0.0
      %896 = vmatprep.subr.mxu0 0.0
      %897 = vmatpush1.xpose.msra.mxu0 0.0
      %898 = vmatprep.subr.mxu0 0.0
      %899 = vmatpush1.xpose.msra.mxu0 0.0
      %900 = vmatprep.subr.mxu0 0.0
      %901 = vmatpush1.xpose.msra.mxu0 0.0
      %902 = vmatprep.mubr.f32.mxu0 0.0
      %903 = vmatmul.mubr.f32.gmra.mrb[0].mxu0 %v834
      %v904 = vpop.f32.mrb[0].mxu0
      %v905 = vadd.f32 0.0, %v904
      %v906 = vpop.f32.mrb[0].mxu0
      %907 = vdwg.mxu0
      %v908 = vsel %vm337, %v905, -inf
      %909 = vmax.xlane.f32.xlu0 %v908
      %v910 = vpop.xlane.xlu0 %909
      %v911 = vsub.f32 %v905, %v910
      %v912 = vmul.f32 %v911, 1.442695
      %v913 = vpow.pop %v912
      %v914 = vsel %vm337, %v913, 0.0
      %915 = vadd.xlane.f32.xlu0 %v914
      %v916 = vpop.xlane.xlu0 %915
      %v917 = vrcp.pop %v916
      %v918 = vmul.f32 %v913, %v917
      %919 = vrot.lane.b32.xlu0 %v330, 40
      %v920 = vpop.permute.xlu0 %919
      %v923 = vsel %vm337, %v918, 0
      %925 = vmatprep.subr.mxu0 0.0
      %926 = vmatpush1.msra.mxu0 %v920
      %927 = vmatprep.subr.mxu0 0.0
      %928 = vmatpush1.msra.mxu0 0.0
      %929 = vmatprep.subr.mxu0 0.0
      %930 = vmatpush1.msra.mxu0 0.0
      %931 = vmatprep.subr.mxu0 0.0
      %932 = vmatpush1.msra.mxu0 0.0
      %933 = vmatprep.subr.mxu0 0.0
      %934 = vmatpush1.msra.mxu0 0.0
      %935 = vmatprep.subr.mxu0 0.0
      %936 = vmatpush1.msra.mxu0 0.0
      %937 = vmatprep.subr.mxu0 0.0
      %938 = vmatpush1.msra.mxu0 0.0
      %939 = vmatprep.subr.mxu0 0.0
      %940 = vmatpush1.msra.mxu0 0.0
      %941 = vmatprep.subr.mxu0 0.0
      %942 = vmatpush1.msra.mxu0 0.0
      %943 = vmatprep.subr.mxu0 0.0
      %944 = vmatpush1.msra.mxu0 0.0
      %945 = vmatprep.subr.mxu0 0.0
      %946 = vmatpush1.msra.mxu0 0.0
      %947 = vmatprep.subr.mxu0 0.0
      %948 = vmatpush1.msra.mxu0 0.0
      %949 = vmatprep.subr.mxu0 0.0
      %950 = vmatpush1.msra.mxu0 0.0
      %951 = vmatprep.subr.mxu0 0.0
      %952 = vmatpush1.msra.mxu0 0.0
      %953 = vmatprep.subr.mxu0 0.0
      %954 = vmatpush1.msra.mxu0 0.0
      %955 = vmatprep.subr.mxu0 0.0
      %956 = vmatpush1.msra.mxu0 0.0
      %957 = vmatprep.subr.mxu0 0.0
      %958 = vmatpush1.msra.mxu0 0.0
      %959 = vmatprep.subr.mxu0 0.0
      %960 = vmatpush1.msra.mxu0 0.0
      %961 = vmatprep.subr.mxu0 0.0
      %962 = vmatpush1.msra.mxu0 0.0
      %963 = vmatprep.subr.mxu0 0.0
      %964 = vmatpush1.msra.mxu0 0.0
      %965 = vmatprep.subr.mxu0 0.0
      %966 = vmatpush1.msra.mxu0 0.0
      %967 = vmatprep.subr.mxu0 0.0
      %968 = vmatpush1.msra.mxu0 0.0
      %969 = vmatprep.subr.mxu0 0.0
      %970 = vmatpush1.msra.mxu0 0.0
      %971 = vmatprep.subr.mxu0 0.0
      %972 = vmatpush1.msra.mxu0 0.0
      %973 = vmatprep.subr.mxu0 0.0
      %974 = vmatpush1.msra.mxu0 0.0
      %975 = vmatprep.subr.mxu0 0.0
      %976 = vmatpush1.msra.mxu0 0.0
      %977 = vmatprep.subr.mxu0 0.0
      %978 = vmatpush1.msra.mxu0 0.0
      %979 = vmatprep.subr.mxu0 0.0
      %980 = vmatpush1.msra.mxu0 0.0
      %981 = vmatprep.subr.mxu0 0.0
      %982 = vmatpush1.msra.mxu0 0.0
      %983 = vmatprep.subr.mxu0 0.0
      %984 = vmatpush1.msra.mxu0 0.0
      %985 = vmatprep.subr.mxu0 0.0
      %986 = vmatpush1.msra.mxu0 0.0
      %987 = vmatprep.subr.mxu0 0.0
      %988 = vmatpush1.msra.mxu0 0.0
      %989 = vmatprep.mubr.f32.mxu0 0.0
      %990 = vmatmul.mubr.f32.gmra.mrb[0].mxu0 %v923
      %v991 = vpop.f32.mrb[0].mxu0
      %v992 = vadd.f32 0.0, %v991
      %v993 = vpop.f32.mrb[0].mxu0
      %994 = vdwg.mxu0
      %996 = vrot.lane.b32.xlu0 %v662, 8
      %v997 = vpop.permute.xlu0 %996
      %1000 = vrot.lane.b32.xlu0 %v827, 16
      %v1001 = vpop.permute.xlu0 %1000
      %1004 = vrot.lane.b32.xlu0 %v992, 24
      %v1005 = vpop.permute.xlu0 %1004
      %v1007 = vsel %vm337, %v497, %v997
      %vm1008 = vcmask 130048
      %v1009 = vsel %vm1008, %v1007, %v1001
      %vm1010 = vcmask 195584
      %v1011 = vsel %vm1010, %v1009, %v1005
      %v1012 = vld [vmem:[%s3] sm:$0xff]
      %v1013 = vld [vmem:[%s3 + $0x8] sm:$0xff]
      %v1014 = vld [vmem:[%s3 + $0x10] sm:$0xff]
      %v1015 = vld [vmem:[%s3 + $0x18] sm:$0xff]
      %v1016 = vld [vmem:[%s4] sm:$0x1]
      %v1018 = vlaneseq
      %v1019 = vshrl.u32 %v1018, 7
      %v1020 = vsub.s32 0, %v1019
      %v1021 = vrot.slane %v1016, %v1020
      %v1024 = vsel %vm259, %v1011, 0
      %1026 = vmatprep.subr.mxu0 0.0
      %1027 = vmatpush1.msra.mxu0 %v1012
      %1028 = vmatprep.subr.mxu0 0.0
      %1029 = vmatpush1.msra.mxu0 %v1013
      %1030 = vmatprep.subr.mxu0 0.0
      %1031 = vmatpush1.msra.mxu0 %v1014
      %1032 = vmatprep.subr.mxu0 0.0
      %1033 = vmatpush1.msra.mxu0 %v1015
      %1034 = vmatprep.subr.mxu0 0.0
      %1035 = vmatpush1.msra.mxu0 0.0
      %1036 = vmatprep.subr.mxu0 0.0
      %1037 = vmatpush1.msra.mxu0 0.0
      %1038 = vmatprep.subr.mxu0 0.0
      %1039 = vmatpush1.msra.mxu0 0.0
      %1040 = vmatprep.subr.mxu0 0.0
      %1041 = vmatpush1.msra.mxu0 0.0
      %1042 = vmatprep.subr.mxu0 0.0
      %1043 = vmatpush1.msra.mxu0 0.0
      %1044 = vmatprep.subr.mxu0 0.0
      %1045 = vmatpush1.msra.mxu0 0.0
      %1046 = vmatprep.subr.mxu0 0.0
      %1047 = vmatpush1.msra.mxu0 0.0
      %1048 = vmatprep.subr.mxu0 0.0
      %1049 = vmatpush1.msra.mxu0 0.0
      %1050 = vmatprep.subr.mxu0 0.0
      %1051 = vmatpush1.msra.mxu0 0.0
      %1052 = vmatprep.subr.mxu0 0.0
      %1053 = vmatpush1.msra.mxu0 0.0
      %1054 = vmatprep.subr.mxu0 0.0
      %1055 = vmatpush1.msra.mxu0 0.0
      %1056 = vmatprep.subr.mxu0 0.0
      %1057 = vmatpush1.msra.mxu0 0.0
      %1058 = vmatprep.subr.mxu0 0.0
      %1059 = vmatpush1.msra.mxu0 0.0
      %1060 = vmatprep.subr.mxu0 0.0
      %1061 = vmatpush1.msra.mxu0 0.0
      %1062 = vmatprep.subr.mxu0 0.0
      %1063 = vmatpush1.msra.mxu0 0.0
      %1064 = vmatprep.subr.mxu0 0.0
      %1065 = vmatpush1.msra.mxu0 0.0
      %1066 = vmatprep.subr.mxu0 0.0
      %1067 = vmatpush1.msra.mxu0 0.0
      %1068 = vmatprep.subr.mxu0 0.0
      %1069 = vmatpush1.msra.mxu0 0.0
      %1070 = vmatprep.subr.mxu0 0.0
      %1071 = vmatpush1.msra.mxu0 0.0
      %1072 = vmatprep.subr.mxu0 0.0
      %1073 = vmatpush1.msra.mxu0 0.0
      %1074 = vmatprep.subr.mxu0 0.0
      %1075 = vmatpush1.msra.mxu0 0.0
      %1076 = vmatprep.subr.mxu0 0.0
      %1077 = vmatpush1.msra.mxu0 0.0
      %1078 = vmatprep.subr.mxu0 0.0
      %1079 = vmatpush1.msra.mxu0 0.0
      %1080 = vmatprep.subr.mxu0 0.0
      %1081 = vmatpush1.msra.mxu0 0.0
      %1082 = vmatprep.subr.mxu0 0.0
      %1083 = vmatpush1.msra.mxu0 0.0
      %1084 = vmatprep.subr.mxu0 0.0
      %1085 = vmatpush1.msra.mxu0 0.0
      %1086 = vmatprep.subr.mxu0 0.0
      %1087 = vmatpush1.msra.mxu0 0.0
      %1088 = vmatprep.subr.mxu0 0.0
      %1089 = vmatpush1.msra.mxu0 0.0
      %1090 = vmatprep.mubr.f32.mxu0 0.0
      %1091 = vmatmul.mubr.f32.gmra.mrb[0].mxu0 %v1024
      %v1092 = vpop.f32.mrb[0].mxu0
      %v1093 = vadd.f32 %v1021, %v1092
      %v1094 = vpop.f32.mrb[0].mxu0
      %1095 = vdwg.mxu0
      %v1096 = vadd.f32 %v1093, %v247
      %v1097 = vld [vmem:[%s5] sm:$0xff]
      %v1098 = vld [vmem:[%s5 + $0x8] sm:$0xff]
      %v1099 = vld [vmem:[%s5 + $0x10] sm:$0xff]
      %v1100 = vld [vmem:[%s5 + $0x18] sm:$0xff]
      %v1102 = vsel %vm259, %v1096, 0
      %1104 = vmatprep.subr.mxu0 0.0
      %1105 = vmatpush1.msra.mxu0 %v1097
      %1106 = vmatprep.subr.mxu0 0.0
      %1107 = vmatpush1.msra.mxu0 %v1098
      %1108 = vmatprep.subr.mxu0 0.0
      %1109 = vmatpush1.msra.mxu0 %v1099
      %1110 = vmatprep.subr.mxu0 0.0
      %1111 = vmatpush1.msra.mxu0 %v1100
      %1112 = vmatprep.subr.mxu0 0.0
      %1113 = vmatpush1.msra.mxu0 0.0
      %1114 = vmatprep.subr.mxu0 0.0
      %1115 = vmatpush1.msra.mxu0 0.0
      %1116 = vmatprep.subr.mxu0 0.0
      %1117 = vmatpush1.msra.mxu0 0.0
      %1118 = vmatprep.subr.mxu0 0.0
      %1119 = vmatpush1.msra.mxu0 0.0
      %1120 = vmatprep.subr.mxu0 0.0
      %1121 = vmatpush1.msra.mxu0 0.0
      %1122 = vmatprep.subr.mxu0 0.0
      %1123 = vmatpush1.msra.mxu0 0.0
      %1124 = vmatprep.subr.mxu0 0.0
      %1125 = vmatpush1.msra.mxu0 0.0
      %1126 = vmatprep.subr.mxu0 0.0
      %1127 = vmatpush1.msra.mxu0 0.0
      %1128 = vmatprep.subr.mxu0 0.0
      %1129 = vmatpush1.msra.mxu0 0.0
      %1130 = vmatprep.subr.mxu0 0.0
      %1131 = vmatpush1.msra.mxu0 0.0
      %1132 = vmatprep.subr.mxu0 0.0
      %1133 = vmatpush1.msra.mxu0 0.0
      %1134 = vmatprep.subr.mxu0 0.0
      %1135 = vmatpush1.msra.mxu0 0.0
      %1136 = vmatprep.subr.mxu0 0.0
      %1137 = vmatpush1.msra.mxu0 0.0
      %1138 = vmatprep.subr.mxu0 0.0
      %1139 = vmatpush1.msra.mxu0 0.0
      %1140 = vmatprep.subr.mxu0 0.0
      %1141 = vmatpush1.msra.mxu0 0.0
      %1142 = vmatprep.subr.mxu0 0.0
      %1143 = vmatpush1.msra.mxu0 0.0
      %1144 = vmatprep.subr.mxu0 0.0
      %1145 = vmatpush1.msra.mxu0 0.0
      %1146 = vmatprep.subr.mxu0 0.0
      %1147 = vmatpush1.msra.mxu0 0.0
      %1148 = vmatprep.subr.mxu0 0.0
      %1149 = vmatpush1.msra.mxu0 0.0
      %1150 = vmatprep.subr.mxu0 0.0
      %1151 = vmatpush1.msra.mxu0 0.0
      %1152 = vmatprep.subr.mxu0 0.0
      %1153 = vmatpush1.msra.mxu0 0.0
      %1154 = vmatprep.subr.mxu0 0.0
      %1155 = vmatpush1.msra.mxu0 0.0
      %1156 = vmatprep.subr.mxu0 0.0
      %1157 = vmatpush1.msra.mxu0 0.0
      %1158 = vmatprep.subr.mxu0 0.0
      %1159 = vmatpush1.msra.mxu0 0.0
      %1160 = vmatprep.subr.mxu0 0.0
      %1161 = vmatpush1.msra.mxu0 0.0
      %1162 = vmatprep.subr.mxu0 0.0
      %1163 = vmatpush1.msra.mxu0 0.0
      %1164 = vmatprep.subr.mxu0 0.0
      %1165 = vmatpush1.msra.mxu0 0.0
      %1166 = vmatprep.subr.mxu0 0.0
      %1167 = vmatpush1.msra.mxu0 0.0
      %1168 = vmatprep.mubr.f32.mxu0 0.0
      %1169 = vmatmul.mubr.f32.gmra.mrb[0].mxu0 %v1102
      %v1170 = vpop.f32.mrb[0].mxu0
      %v1171 = vadd.f32 %v1096, %v1170
      %v1172 = vpop.f32.mrb[0].mxu0
      %1173 = vdwg.mxu0
      %1174 = vst.msk [vmem:[%s246] sm:$0xff] %vm259, %v1171
      %p1175 = scmp.lt.s32.totalorder %s17, 1
      %s1176 = scalar_select %p1175, %s17, 1
      %s1177 = smul.addr %s1176, 8
      %s1178 = scalar_lea.vmem %s6, %s1177
      // Predicated region
      $region45: #{transformer_layer_forward.1} parent=43 // pred_check
        %p1179 = pneg %p166
      $region46: #{transformer_layer_forward.1} parent=43 // pred_check_branch
        %1181 = sbr.rel (%p1179) target = $region48
      $region47: #{transformer_layer_forward.1} parent=43 // pred_region
        _
      $region48: #{transformer_layer_forward.1} parent=43 // pred_fallthru
        _
    $region44: #{transformer_layer_forward.1} parent=5 // pred_fallthru
      _
    %p1182 = scmp.le.s32.totalorder 2, %s12
    // Predicated region
    $region49: #{transformer_layer_forward.1} parent=5 // pred_check
      %p1183 = pneg %p1182
    $region50: #{transformer_layer_forward.1} parent=5 // pred_check_branch
      %1185 = sbr.rel (%p1183) target = $region52
    $region51: #{transformer_layer_forward.1} parent=5 // pred_region
      %s1186 = ssub.s32 %s12, 2
      // Predicated region
      $region53: #{transformer_layer_forward.1} parent=51 // pred_check
        %p1187 = pneg %p172
      $region54: #{transformer_layer_forward.1} parent=51 // pred_check_branch
        %1189 = sbr.rel (%p1187) target = $region56
      $region55: #{transformer_layer_forward.1} parent=51 // pred_region
        %p1190 = scmp.lt.s32.totalorder %s18, 1
        %s1191 = scalar_select %p1190, %s18, 1
        %s1192 = smul.addr %s1191, 8
        %s1193 = scalar_lea.vmem %s6, %s1192
      $region56: #{transformer_layer_forward.1} parent=51 // pred_fallthru
        _
    $region52: #{transformer_layer_forward.1} parent=5 // pred_fallthru
      _
  $region6: #{transformer_layer_forward.1} parent=0 // loop_footer
    %s16 = sadd.s32 1, %s12
  $region7: #{transformer_layer_forward.1} parent=0 // loop_footer_branch
    %11 = sbr.rel target = $region3
  $region8: #{transformer_layer_forward.1} parent=0 // loop_exit
    _

</llo_original>
